<compile_context>
chip_gen: v6e
topology: v6e:2x2x1
jax: 0.10.0
libtpu: 0.0.40
codegen_flags: <defaults>
</compile_context>

<pallas_src>
import jax
import jax.numpy as jnp
from jax.experimental import pallas as pl
from jax.experimental.pallas import tpu as pltpu


# Layer widths fixed by the PyTorch module (hidden part of the Sequential).
HIDDEN = (200, 50, 20, 10)
LANE = 128


def _round_up(n, m):
    return ((n + m - 1) // m) * m


def _mlp_kernel(x_ref,
                w1_ref, b1_ref,
                w2_ref, b2_ref,
                w3_ref, b3_ref,
                w4_ref, b4_ref,
                w5_ref, b5_ref,
                o_ref):
    """Whole MLP chain on one batch tile; all (padded) params VMEM-resident.

    Dots run with bf16 (or f32) operands and f32 accumulation; bias add, ReLU
    and sigmoid stay in f32 (VPU/EUP), h is cast back to the operand dtype only
    to feed the next MXU matmul.
    """
    operand_dtype = x_ref.dtype
    h = x_ref[...]

    for w_ref, b_ref in ((w1_ref, b1_ref), (w2_ref, b2_ref),
                         (w3_ref, b3_ref), (w4_ref, b4_ref)):
        z = jnp.dot(h, w_ref[...], preferred_element_type=jnp.float32) + b_ref[...]
        h = jnp.maximum(z, 0.0).astype(operand_dtype)

    z = jnp.dot(h, w5_ref[...], preferred_element_type=jnp.float32) + b5_ref[...]
    o_ref[...] = (1.0 / (1.0 + jnp.exp(-z))).astype(o_ref.dtype)


def _const_spec(shape):
    """Grid-invariant (weight/bias) block: full array, single-buffered."""
    try:
        return pl.BlockSpec(shape, lambda i: (0, 0), pipeline_mode=pl.Buffered(1))
    except TypeError:  # older Pallas without pipeline_mode: fall back to default
        return pl.BlockSpec(shape, lambda i: (0, 0))


def _pad_params(params):
    """Zero-pad every layer's output width to a lane (128) multiple.

    Zeros propagate exactly through Linear+ReLU (0-columns stay 0, 0-rows
    contribute 0), so the sliced result is bit-identical in f32.
    """
    padded = []
    prev_out_pad = None
    for (w, b) in params:
        fan_in, fan_out = w.shape
        in_pad = fan_in if prev_out_pad is None else prev_out_pad
        out_pad = _round_up(fan_out, LANE)
        w_p = jnp.zeros((in_pad, out_pad), w.dtype).at[:fan_in, :fan_out].set(w)
        b_p = jnp.zeros((1, out_pad), b.dtype).at[:, :fan_out].set(b)
        padded.append((w_p, b_p))
        prev_out_pad = out_pad
    return padded


def torch_mlp_forward(x, params, *, block_b=512, use_bf16=True,
                      vmem_limit_bytes=32 * 1024 * 1024):
    """params: list of (W, b) with W (in, out) and b (1, out), 5 layers.

    block_b: batch tile (tune 512-2048 for large B; on v7x keep block_b <= B/2
    so the "parallel" batch axis shards across both TensorCores).
    """
    B, F = x.shape
    n_labels = params[-1][0].shape[1]

    operand_dtype = jnp.bfloat16 if use_bf16 else jnp.float32
    sublane = 16 if use_bf16 else 8

    # --- pad params to lane multiples, cast MXU operands, keep biases f32 ---
    padded_params = _pad_params(params)
    out_lanes = padded_params[-1][0].shape[1]

    flat_params = []
    param_specs = []
    for (w, b) in padded_params:
        w = w.astype(operand_dtype)
        b = b.astype(jnp.float32)
        param_specs.append(_const_spec(w.shape))
        param_specs.append(_const_spec(b.shape))
        flat_params.extend([w, b])

    # --- batch tiling: clamp tile to the batch, pad batch to a tile multiple ---
    block_b = max(sublane, min(block_b, _round_up(B, sublane)))
    block_b = _round_up(block_b, sublane)
    B_pad = _round_up(B, block_b)

    x_p = x.astype(operand_dtype)
    if B_pad != B:
        x_p = jnp.pad(x_p, ((0, B_pad - B), (0, 0)))

    grid = (B_pad // block_b,)
    out = pl.pallas_call(
        _mlp_kernel,
        out_shape=jax.ShapeDtypeStruct((B_pad, out_lanes), jnp.float32),
        grid_spec=pltpu.PrefetchScalarGridSpec(
            num_scalar_prefetch=0,
            grid=grid,
            in_specs=[pl.BlockSpec((block_b, F), lambda i: (i, 0))] + param_specs,
            out_specs=pl.BlockSpec((block_b, out_lanes), lambda i: (i, 0)),
        ),
        compiler_params=pltpu.CompilerParams(
            dimension_semantics=("parallel",),
            vmem_limit_bytes=vmem_limit_bytes,
        ),
    )(x_p, *flat_params)

    # Slice away the zero-padded batch rows and the lane-padded output columns.
    return out[:B, :n_labels]


def init_params(key, n_features, n_labels):
    """Deterministic init mimicking PyTorch Linear default (U(-1/sqrt(fan_in), ..))."""
    dims = (n_features,) + HIDDEN + (n_labels,)
    params = []
    for i in range(len(dims) - 1):
        fan_in, fan_out = dims[i], dims[i + 1]
        key, kw, kb = jax.random.split(key, 3)
        bound = 1.0 / jnp.sqrt(fan_in)
        w = jax.random.uniform(kw, (fan_in, fan_out), jnp.float32, -bound, bound)
        b = jax.random.uniform(kb, (1, fan_out), jnp.float32, -bound, bound)
        params.append((w, b))
    return params


def reference_forward(x, params):
    h = x
    for (w, b) in params[:-1]:
        h = jnp.maximum(h @ w + b, 0.0)
    w, b = params[-1]
    return jax.nn.sigmoid(h @ w + b)


if __name__ == "__main__":
    key = jax.random.PRNGKey(0)
    # Small test shapes; B deliberately not a tile multiple to exercise the
    # batch-padding path, and block_b small enough that the grid has >1 step.
    B, n_features, n_labels = 72, 32, 4

    kx, kp = jax.random.split(key)
    x = jax.random.normal(kx, (B, n_features), jnp.float32)
    params = init_params(kp, n_features, n_labels)
    y_ref = reference_forward(x, params)

    # f32 path: exact (validates padding / tiling / layout plumbing).
    y_f32 = jax.block_until_ready(
        torch_mlp_forward(x, params, block_b=32, use_bf16=False))
    assert y_f32.shape == (B, n_labels)
    assert jnp.allclose(y_f32, y_ref, atol=1e-5, rtol=1e-5), "f32 mismatch vs reference"

    # bf16-MXU path (the optimized one): f32 accumulation, looser tolerance.
    y_bf16 = jax.block_until_ready(
        torch_mlp_forward(x, params, block_b=32, use_bf16=True))
    assert y_bf16.shape == (B, n_labels)
    max_err = float(jnp.max(jnp.abs(y_bf16 - y_ref)))
    assert max_err < 5e-2, f"bf16 mismatch vs reference: max abs err {max_err}"

    print("KERNEL_OK")
</pallas_src>

<mosaic_0001>
module attributes {stable_mosaic.version = 11 : i64} {
  func.func @_mlp_kernel(%arg0: i32, %arg1: memref<32x32xf32, #tpu.memory_space<vmem>>, %arg2: memref<32x256xf32, #tpu.memory_space<vmem>>, %arg3: memref<1x256xf32, #tpu.memory_space<vmem>>, %arg4: memref<256x128xf32, #tpu.memory_space<vmem>>, %arg5: memref<1x128xf32, #tpu.memory_space<vmem>>, %arg6: memref<128x128xf32, #tpu.memory_space<vmem>>, %arg7: memref<1x128xf32, #tpu.memory_space<vmem>>, %arg8: memref<128x128xf32, #tpu.memory_space<vmem>>, %arg9: memref<1x128xf32, #tpu.memory_space<vmem>>, %arg10: memref<128x128xf32, #tpu.memory_space<vmem>>, %arg11: memref<1x128xf32, #tpu.memory_space<vmem>>, %arg12: memref<32x128xf32, #tpu.memory_space<vmem>>) attributes {dimension_semantics = [#tpu.dimension_semantics<parallel>], iteration_bounds = array<i64: 3>, scalar_prefetch = 0 : i64, scratch_operands = 0 : i64, tpu.core_type = #tpu.core_type<tc>, window_params = [{transform_indices = @transform_0, window_bounds = array<i64: 32, 32>}, {pipeline_mode = #tpu.pipeline_mode<synchronous>, transform_indices = @transform_1, window_bounds = array<i64: 32, 256>}, {pipeline_mode = #tpu.pipeline_mode<synchronous>, transform_indices = @transform_2, window_bounds = array<i64: 1, 256>}, {pipeline_mode = #tpu.pipeline_mode<synchronous>, transform_indices = @transform_3, window_bounds = array<i64: 256, 128>}, {pipeline_mode = #tpu.pipeline_mode<synchronous>, transform_indices = @transform_4, window_bounds = array<i64: 1, 128>}, {pipeline_mode = #tpu.pipeline_mode<synchronous>, transform_indices = @transform_5, window_bounds = array<i64: 128, 128>}, {pipeline_mode = #tpu.pipeline_mode<synchronous>, transform_indices = @transform_6, window_bounds = array<i64: 1, 128>}, {pipeline_mode = #tpu.pipeline_mode<synchronous>, transform_indices = @transform_7, window_bounds = array<i64: 128, 128>}, {pipeline_mode = #tpu.pipeline_mode<synchronous>, transform_indices = @transform_8, window_bounds = array<i64: 1, 128>}, {pipeline_mode = #tpu.pipeline_mode<synchronous>, transform_indices = @transform_9, window_bounds = array<i64: 128, 128>}, {pipeline_mode = #tpu.pipeline_mode<synchronous>, transform_indices = @transform_10, window_bounds = array<i64: 1, 128>}, {transform_indices = @transform_11, window_bounds = array<i64: 32, 128>}]} {
    %c0 = arith.constant 0 : index
    %c0_0 = arith.constant 0 : index
    %0 = vector.load %arg1[%c0, %c0_0] : memref<32x32xf32, #tpu.memory_space<vmem>>, vector<32x32xf32>
    %c0_1 = arith.constant 0 : index
    %c0_2 = arith.constant 0 : index
    %1 = vector.load %arg2[%c0_1, %c0_2] : memref<32x256xf32, #tpu.memory_space<vmem>>, vector<32x256xf32>
    %cst = arith.constant dense<0.000000e+00> : vector<32x256xf32>
    %2 = tpu.matmul %0, %1, %cst {dimension_numbers = #tpu.dot_dimension_numbers<[1], [0], [0], [1], [0, 0, 1, 1], [], []>} : vector<32x32xf32>, vector<32x256xf32>, vector<32x256xf32> -> vector<32x256xf32>
    %c0_3 = arith.constant 0 : index
    %c0_4 = arith.constant 0 : index
    %3 = vector.load %arg3[%c0_3, %c0_4] : memref<1x256xf32, #tpu.memory_space<vmem>>, vector<1x256xf32>
    %4 = vector.broadcast %3 : vector<1x256xf32> to vector<32x256xf32>
    %5 = arith.addf %2, %4 : vector<32x256xf32>
    %cst_5 = arith.constant 0.000000e+00 : f32
    %6 = vector.broadcast %cst_5 : f32 to vector<32x256xf32>
    %7 = arith.maximumf %5, %6 : vector<32x256xf32>
    %c0_6 = arith.constant 0 : index
    %c0_7 = arith.constant 0 : index
    %8 = vector.load %arg4[%c0_6, %c0_7] : memref<256x128xf32, #tpu.memory_space<vmem>>, vector<256x128xf32>
    %cst_8 = arith.constant dense<0.000000e+00> : vector<32x128xf32>
    %9 = tpu.matmul %7, %8, %cst_8 {dimension_numbers = #tpu.dot_dimension_numbers<[1], [0], [0], [1], [0, 0, 1, 1], [], []>} : vector<32x256xf32>, vector<256x128xf32>, vector<32x128xf32> -> vector<32x128xf32>
    %c0_9 = arith.constant 0 : index
    %c0_10 = arith.constant 0 : index
    %10 = vector.load %arg5[%c0_9, %c0_10] : memref<1x128xf32, #tpu.memory_space<vmem>>, vector<1x128xf32>
    %11 = vector.broadcast %10 : vector<1x128xf32> to vector<32x128xf32>
    %12 = arith.addf %9, %11 : vector<32x128xf32>
    %cst_11 = arith.constant 0.000000e+00 : f32
    %13 = vector.broadcast %cst_11 : f32 to vector<32x128xf32>
    %14 = arith.maximumf %12, %13 : vector<32x128xf32>
    %c0_12 = arith.constant 0 : index
    %c0_13 = arith.constant 0 : index
    %15 = vector.load %arg6[%c0_12, %c0_13] : memref<128x128xf32, #tpu.memory_space<vmem>>, vector<128x128xf32>
    %cst_14 = arith.constant dense<0.000000e+00> : vector<32x128xf32>
    %16 = tpu.matmul %14, %15, %cst_14 {dimension_numbers = #tpu.dot_dimension_numbers<[1], [0], [0], [1], [0, 0, 1, 1], [], []>} : vector<32x128xf32>, vector<128x128xf32>, vector<32x128xf32> -> vector<32x128xf32>
    %c0_15 = arith.constant 0 : index
    %c0_16 = arith.constant 0 : index
    %17 = vector.load %arg7[%c0_15, %c0_16] : memref<1x128xf32, #tpu.memory_space<vmem>>, vector<1x128xf32>
    %18 = vector.broadcast %17 : vector<1x128xf32> to vector<32x128xf32>
    %19 = arith.addf %16, %18 : vector<32x128xf32>
    %cst_17 = arith.constant 0.000000e+00 : f32
    %20 = vector.broadcast %cst_17 : f32 to vector<32x128xf32>
    %21 = arith.maximumf %19, %20 : vector<32x128xf32>
    %c0_18 = arith.constant 0 : index
    %c0_19 = arith.constant 0 : index
    %22 = vector.load %arg8[%c0_18, %c0_19] : memref<128x128xf32, #tpu.memory_space<vmem>>, vector<128x128xf32>
    %cst_20 = arith.constant dense<0.000000e+00> : vector<32x128xf32>
    %23 = tpu.matmul %21, %22, %cst_20 {dimension_numbers = #tpu.dot_dimension_numbers<[1], [0], [0], [1], [0, 0, 1, 1], [], []>} : vector<32x128xf32>, vector<128x128xf32>, vector<32x128xf32> -> vector<32x128xf32>
    %c0_21 = arith.constant 0 : index
    %c0_22 = arith.constant 0 : index
    %24 = vector.load %arg9[%c0_21, %c0_22] : memref<1x128xf32, #tpu.memory_space<vmem>>, vector<1x128xf32>
    %25 = vector.broadcast %24 : vector<1x128xf32> to vector<32x128xf32>
    %26 = arith.addf %23, %25 : vector<32x128xf32>
    %cst_23 = arith.constant 0.000000e+00 : f32
    %27 = vector.broadcast %cst_23 : f32 to vector<32x128xf32>
    %28 = arith.maximumf %26, %27 : vector<32x128xf32>
    %c0_24 = arith.constant 0 : index
    %c0_25 = arith.constant 0 : index
    %29 = vector.load %arg10[%c0_24, %c0_25] : memref<128x128xf32, #tpu.memory_space<vmem>>, vector<128x128xf32>
    %cst_26 = arith.constant dense<0.000000e+00> : vector<32x128xf32>
    %30 = tpu.matmul %28, %29, %cst_26 {dimension_numbers = #tpu.dot_dimension_numbers<[1], [0], [0], [1], [0, 0, 1, 1], [], []>} : vector<32x128xf32>, vector<128x128xf32>, vector<32x128xf32> -> vector<32x128xf32>
    %c0_27 = arith.constant 0 : index
    %c0_28 = arith.constant 0 : index
    %31 = vector.load %arg11[%c0_27, %c0_28] : memref<1x128xf32, #tpu.memory_space<vmem>>, vector<1x128xf32>
    %32 = vector.broadcast %31 : vector<1x128xf32> to vector<32x128xf32>
    %33 = arith.addf %30, %32 : vector<32x128xf32>
    %cst_29 = arith.constant 0.000000e+00 : f32
    %34 = vector.broadcast %cst_29 : f32 to vector<32x128xf32>
    %35 = arith.subf %34, %33 : vector<32x128xf32>
    %36 = math.exp %35 : vector<32x128xf32>
    %cst_30 = arith.constant 1.000000e+00 : f32
    %37 = vector.broadcast %cst_30 : f32 to vector<32x128xf32>
    %38 = arith.addf %37, %36 : vector<32x128xf32>
    %cst_31 = arith.constant 1.000000e+00 : f32
    %39 = vector.broadcast %cst_31 : f32 to vector<32x128xf32>
    %40 = arith.divf %39, %38 : vector<32x128xf32>
    %c0_32 = arith.constant 0 : index
    %c0_33 = arith.constant 0 : index
    %41 = vector.load %arg12[%c0_32, %c0_33] : memref<32x128xf32, #tpu.memory_space<vmem>>, vector<32x128xf32>
    tpu.vector_store %arg12[%c0_32, %c0_33], %40 {strides = array<i32>} : memref<32x128xf32, #tpu.memory_space<vmem>>, vector<32x128xf32>,
    return
  }
  func.func @transform_0(%arg0: i32) -> (i32, i32) {
    %c0_i32 = arith.constant 0 : i32
    %c0_i32_0 = arith.constant 0 : i32
    return %arg0, %c0_i32 : i32, i32
  }
  func.func @transform_1(%arg0: i32) -> (i32, i32) {
    %c0_i32 = arith.constant 0 : i32
    %c0_i32_0 = arith.constant 0 : i32
    %c0_i32_1 = arith.constant 0 : i32
    return %c0_i32, %c0_i32_0 : i32, i32
  }
  func.func @transform_2(%arg0: i32) -> (i32, i32) {
    %c0_i32 = arith.constant 0 : i32
    %c0_i32_0 = arith.constant 0 : i32
    %c0_i32_1 = arith.constant 0 : i32
    return %c0_i32, %c0_i32_0 : i32, i32
  }
  func.func @transform_3(%arg0: i32) -> (i32, i32) {
    %c0_i32 = arith.constant 0 : i32
    %c0_i32_0 = arith.constant 0 : i32
    %c0_i32_1 = arith.constant 0 : i32
    return %c0_i32, %c0_i32_0 : i32, i32
  }
  func.func @transform_4(%arg0: i32) -> (i32, i32) {
    %c0_i32 = arith.constant 0 : i32
    %c0_i32_0 = arith.constant 0 : i32
    %c0_i32_1 = arith.constant 0 : i32
    return %c0_i32, %c0_i32_0 : i32, i32
  }
  func.func @transform_5(%arg0: i32) -> (i32, i32) {
    %c0_i32 = arith.constant 0 : i32
    %c0_i32_0 = arith.constant 0 : i32
    %c0_i32_1 = arith.constant 0 : i32
    return %c0_i32, %c0_i32_0 : i32, i32
  }
  func.func @transform_6(%arg0: i32) -> (i32, i32) {
    %c0_i32 = arith.constant 0 : i32
    %c0_i32_0 = arith.constant 0 : i32
    %c0_i32_1 = arith.constant 0 : i32
    return %c0_i32, %c0_i32_0 : i32, i32
  }
  func.func @transform_7(%arg0: i32) -> (i32, i32) {
    %c0_i32 = arith.constant 0 : i32
    %c0_i32_0 = arith.constant 0 : i32
    %c0_i32_1 = arith.constant 0 : i32
    return %c0_i32, %c0_i32_0 : i32, i32
  }
  func.func @transform_8(%arg0: i32) -> (i32, i32) {
    %c0_i32 = arith.constant 0 : i32
    %c0_i32_0 = arith.constant 0 : i32
    %c0_i32_1 = arith.constant 0 : i32
    return %c0_i32, %c0_i32_0 : i32, i32
  }
  func.func @transform_9(%arg0: i32) -> (i32, i32) {
    %c0_i32 = arith.constant 0 : i32
    %c0_i32_0 = arith.constant 0 : i32
    %c0_i32_1 = arith.constant 0 : i32
    return %c0_i32, %c0_i32_0 : i32, i32
  }
  func.func @transform_10(%arg0: i32) -> (i32, i32) {
    %c0_i32 = arith.constant 0 : i32
    %c0_i32_0 = arith.constant 0 : i32
    %c0_i32_1 = arith.constant 0 : i32
    return %c0_i32, %c0_i32_0 : i32, i32
  }
  func.func @transform_11(%arg0: i32) -> (i32, i32) {
    %c0_i32 = arith.constant 0 : i32
    %c0_i32_0 = arith.constant 0 : i32
    return %arg0, %c0_i32 : i32, i32
  }
}

</mosaic_0001>

<llo_original>
// kernel: tpu_custom_call.1
$region0: #{tpu_custom_call.1}
  #allocation0 [shape = 'u32[]', space=smem, size = 0x4, offset = 0x4, fixed_abs, tag = 'smem constant byte address 0x4 - core index']
  #allocation1 [shape = 'u32[144,128]{1,0:T(1,128)}', space=vmem, size = 0x12000, scoped, tag = 'internal scratch']
  %s0 = inlined_call_operand.vmem [shape: f32[96,32], index: 0, kind: input, shape index: {}]
  %s1 = inlined_call_operand.hbm [shape: f32[32,256], index: 1, kind: input, shape index: {}]
  %s2 = inlined_call_operand.vmem [shape: f32[1,256], index: 2, kind: input, shape index: {}]
  %s3 = inlined_call_operand.hbm [shape: f32[256,128], index: 3, kind: input, shape index: {}]
  %s4 = inlined_call_operand.vmem [shape: f32[1,128], index: 4, kind: input, shape index: {}]
  %s5 = inlined_call_operand.vmem [shape: f32[128,128], index: 5, kind: input, shape index: {}]
  %s6 = inlined_call_operand.vmem [shape: f32[1,128], index: 6, kind: input, shape index: {}]
  %s7 = inlined_call_operand.hbm [shape: f32[128,128], index: 7, kind: input, shape index: {}]
  %s8 = inlined_call_operand.vmem [shape: f32[1,128], index: 8, kind: input, shape index: {}]
  %s9 = inlined_call_operand.hbm [shape: f32[128,128], index: 9, kind: input, shape index: {}]
  %s10 = inlined_call_operand.vmem [shape: f32[1,128], index: 10, kind: input, shape index: {}]
  %s11 = inlined_call_operand.hbm [shape: f32[96,128], index: 11, kind: output, shape index: {}]
  %s12 = sld [smem:[#allocation0]]
  $region93: #{tpu_custom_call.1} parent=0
    _
  %s14 = ssub.s32 1, %s12
  %s15 = scalar_select 0, %s14, %s12
  $region1: #{tpu_custom_call.1} parent=0
    #allocation2 [shape = 'u8[32768]{0}', space=vmem, size = 0x8000, scoped, tag = 'input window, operand 1, single buffered']
    #allocation3 [shape = 's32[2]{0}', space=sflag, size = 0x8, scoped, tag = 'scoped memory for tpu_custom_call.1']
    #allocation4 [shape = 's32[2]{0}', space=sflag, size = 0x8, scoped, tag = 'scoped memory for tpu_custom_call.1']
    #allocation5 [shape = 'u8[131072]{0}', space=vmem, size = 0x20000, scoped, tag = 'input window, operand 3, single buffered']
    #allocation6 [shape = 's32[1]{0}', space=sflag, size = 0x4, scoped, tag = 'scoped memory for tpu_custom_call.1']
    #allocation7 [shape = 'u8[65536]{0}', space=vmem, size = 0x10000, scoped, tag = 'input window, operand 7, single buffered']
    #allocation8 [shape = 'u8[65536]{0}', space=vmem, size = 0x10000, scoped, tag = 'input window, operand 9, single buffered']
    #allocation9 [shape = 's32[1]{0}', space=sflag, size = 0x4, scoped, tag = 'scoped memory for tpu_custom_call.1']
    #allocation10 [shape = 'u8[32768]{0}', space=vmem, size = 0x8000, scoped, tag = 'output window, operand 0']
    %16 = vsyncpa [#allocation3], 0
    %17 = vsyncpa [#allocation6], 0
    %18 = vsyncpa [#allocation9], 0
    %19 = vsyncpa [#allocation4], 0
    %s20 = scalar_lea.sflag [#allocation4], 1
    %21 = vsyncpa %s20, 0
    loop: start=0, step=1, limit=5
    $region2: #{tpu_custom_call.1} parent=1 // loop_pre_header
      _
    $region3: #{tpu_custom_call.1} parent=1 // loop_header
      %s23 = sphi 0, %s27
      %p24 = scmp.ge.s32.totalorder %s23, 5
      %s33 = sphi 0, %s35
      %s36 = sphi 0, %s33
      %s37 = sphi 0, %s36
      %s53 = sphi 0, %s37
      %s57 = sphi 0, %s57
      %s59 = sphi 0, %s57
      %s60 = sphi 0, %s59
      %s74 = sphi 0, %s60
      %s78 = sphi 0, %s78
      %s80 = sphi 0, %s78
      %s81 = sphi 0, %s80
      %s95 = sphi 0, %s81
      %s99 = sphi 0, %s99
      %s101 = sphi 0, %s99
      %s102 = sphi 0, %s101
      %s116 = sphi 0, %s102
      %s120 = sphi 0, %s120
      %s122 = sphi 0, %s120
      %s123 = sphi 0, %s122
      %s137 = sphi 0, %s123
      %s141 = sphi 0, %s141
      %s143 = sphi 0, %s141
      %s144 = sphi 0, %s143
      %s158 = sphi 0, %s144
      %s162 = sphi 0, %s162
      %s164 = sphi 0, %s162
      %s165 = sphi 0, %s164
      %s179 = sphi 0, %s165
      %s183 = sphi 0, %s183
      %s185 = sphi 0, %s183
      %s186 = sphi 0, %s185
      %s200 = sphi 0, %s186
      %s204 = sphi 0, %s204
      %s206 = sphi 0, %s204
      %s207 = sphi 0, %s206
      %s221 = sphi 0, %s207
      %s225 = sphi 0, %s225
      %s227 = sphi 0, %s225
      %s228 = sphi 0, %s227
      %s242 = sphi 0, %s228
      %s246 = sphi 0, %s246
      %s248 = sphi 0, %s246
      %s249 = sphi 0, %s248
      %s263 = sphi 0, %s249
      %s269 = sphi 0, %s271
      %s272 = sphi 0, %s269
      %s273 = sphi 0, %s272
      %s289 = sphi 0, %s273
    $region4: #{tpu_custom_call.1} parent=1 // loop_header_branch
      %26 = sbr.rel (%p24) target = $region8
    $region5: #{tpu_custom_call.1} parent=1 // loop_body
      %s28 = ssub.s32 %s23, 1
      %s29 = ssub.s32 %s23, 2
      %s30 = sadd.s32 %s23, 1
      %s31 = ssub.s32 %s23, %s30
      %p32 = scmp.eq.s32.totalorder %s31, 0
      %s34 = sadd.s32 %s33, 1
      %s35 = scalar_select %p32, %s33, %s34
      %p38 = pneg %p32
      %p39 = scmp.eq.s32.totalorder %s23, 2
      %p40 = por %p38, %p39
      %p41 = scmp.ne.s32.totalorder %s33, %s36
      %p42 = scmp.eq.s32.totalorder %s23, 0
      %p43 = por %p41, %p42
      %p44 = scmp.ne.s32.totalorder %s33, %s36
      %p45 = scmp.eq.s32.totalorder %s28, 2
      %p46 = por %p44, %p45
      %p47 = scmp.ne.s32.totalorder %s36, %s37
      %p48 = scmp.eq.s32.totalorder %s28, 0
      %p49 = por %p47, %p48
      %p50 = scmp.ne.s32.totalorder %s36, %s37
      %p51 = scmp.eq.s32.totalorder %s29, 2
      %p52 = por %p50, %p51
      %p54 = scmp.ne.s32.totalorder %s37, %s53
      %p55 = scmp.eq.s32.totalorder %s29, 0
      %p56 = por %p54, %p55
      %s58 = sadd.s32 %s57, 1
      %p61 = scmp.eq.s32.totalorder %s23, 2
      %p62 = scmp.ne.s32.totalorder %s57, %s59
      %p63 = scmp.eq.s32.totalorder %s23, 0
      %p64 = por %p62, %p63
      %p65 = scmp.ne.s32.totalorder %s57, %s59
      %p66 = scmp.eq.s32.totalorder %s28, 2
      %p67 = por %p65, %p66
      %p68 = scmp.ne.s32.totalorder %s59, %s60
      %p69 = scmp.eq.s32.totalorder %s28, 0
      %p70 = por %p68, %p69
      %p71 = scmp.ne.s32.totalorder %s59, %s60
      %p72 = scmp.eq.s32.totalorder %s29, 2
      %p73 = por %p71, %p72
      %p75 = scmp.ne.s32.totalorder %s60, %s74
      %p76 = scmp.eq.s32.totalorder %s29, 0
      %p77 = por %p75, %p76
      %s79 = sadd.s32 %s78, 1
      %p82 = scmp.eq.s32.totalorder %s23, 2
      %p83 = scmp.ne.s32.totalorder %s78, %s80
      %p84 = scmp.eq.s32.totalorder %s23, 0
      %p85 = por %p83, %p84
      %p86 = scmp.ne.s32.totalorder %s78, %s80
      %p87 = scmp.eq.s32.totalorder %s28, 2
      %p88 = por %p86, %p87
      %p89 = scmp.ne.s32.totalorder %s80, %s81
      %p90 = scmp.eq.s32.totalorder %s28, 0
      %p91 = por %p89, %p90
      %p92 = scmp.ne.s32.totalorder %s80, %s81
      %p93 = scmp.eq.s32.totalorder %s29, 2
      %p94 = por %p92, %p93
      %p96 = scmp.ne.s32.totalorder %s81, %s95
      %p97 = scmp.eq.s32.totalorder %s29, 0
      %p98 = por %p96, %p97
      %s100 = sadd.s32 %s99, 1
      %p103 = scmp.eq.s32.totalorder %s23, 2
      %p104 = scmp.ne.s32.totalorder %s99, %s101
      %p105 = scmp.eq.s32.totalorder %s23, 0
      %p106 = por %p104, %p105
      %p107 = scmp.ne.s32.totalorder %s99, %s101
      %p108 = scmp.eq.s32.totalorder %s28, 2
      %p109 = por %p107, %p108
      %p110 = scmp.ne.s32.totalorder %s101, %s102
      %p111 = scmp.eq.s32.totalorder %s28, 0
      %p112 = por %p110, %p111
      %p113 = scmp.ne.s32.totalorder %s101, %s102
      %p114 = scmp.eq.s32.totalorder %s29, 2
      %p115 = por %p113, %p114
      %p117 = scmp.ne.s32.totalorder %s102, %s116
      %p118 = scmp.eq.s32.totalorder %s29, 0
      %p119 = por %p117, %p118
      %s121 = sadd.s32 %s120, 1
      %p124 = scmp.eq.s32.totalorder %s23, 2
      %p125 = scmp.ne.s32.totalorder %s120, %s122
      %p126 = scmp.eq.s32.totalorder %s23, 0
      %p127 = por %p125, %p126
      %p128 = scmp.ne.s32.totalorder %s120, %s122
      %p129 = scmp.eq.s32.totalorder %s28, 2
      %p130 = por %p128, %p129
      %p131 = scmp.ne.s32.totalorder %s122, %s123
      %p132 = scmp.eq.s32.totalorder %s28, 0
      %p133 = por %p131, %p132
      %p134 = scmp.ne.s32.totalorder %s122, %s123
      %p135 = scmp.eq.s32.totalorder %s29, 2
      %p136 = por %p134, %p135
      %p138 = scmp.ne.s32.totalorder %s123, %s137
      %p139 = scmp.eq.s32.totalorder %s29, 0
      %p140 = por %p138, %p139
      %s142 = sadd.s32 %s141, 1
      %p145 = scmp.eq.s32.totalorder %s23, 2
      %p146 = scmp.ne.s32.totalorder %s141, %s143
      %p147 = scmp.eq.s32.totalorder %s23, 0
      %p148 = por %p146, %p147
      %p149 = scmp.ne.s32.totalorder %s141, %s143
      %p150 = scmp.eq.s32.totalorder %s28, 2
      %p151 = por %p149, %p150
      %p152 = scmp.ne.s32.totalorder %s143, %s144
      %p153 = scmp.eq.s32.totalorder %s28, 0
      %p154 = por %p152, %p153
      %p155 = scmp.ne.s32.totalorder %s143, %s144
      %p156 = scmp.eq.s32.totalorder %s29, 2
      %p157 = por %p155, %p156
      %p159 = scmp.ne.s32.totalorder %s144, %s158
      %p160 = scmp.eq.s32.totalorder %s29, 0
      %p161 = por %p159, %p160
      %s163 = sadd.s32 %s162, 1
      %p166 = scmp.eq.s32.totalorder %s23, 2
      %p167 = scmp.ne.s32.totalorder %s162, %s164
      %p168 = scmp.eq.s32.totalorder %s23, 0
      %p169 = por %p167, %p168
      %p170 = scmp.ne.s32.totalorder %s162, %s164
      %p171 = scmp.eq.s32.totalorder %s28, 2
      %p172 = por %p170, %p171
      %p173 = scmp.ne.s32.totalorder %s164, %s165
      %p174 = scmp.eq.s32.totalorder %s28, 0
      %p175 = por %p173, %p174
      %p176 = scmp.ne.s32.totalorder %s164, %s165
      %p177 = scmp.eq.s32.totalorder %s29, 2
      %p178 = por %p176, %p177
      %p180 = scmp.ne.s32.totalorder %s165, %s179
      %p181 = scmp.eq.s32.totalorder %s29, 0
      %p182 = por %p180, %p181
      %s184 = sadd.s32 %s183, 1
      %p187 = scmp.eq.s32.totalorder %s23, 2
      %p188 = scmp.ne.s32.totalorder %s183, %s185
      %p189 = scmp.eq.s32.totalorder %s23, 0
      %p190 = por %p188, %p189
      %p191 = scmp.ne.s32.totalorder %s183, %s185
      %p192 = scmp.eq.s32.totalorder %s28, 2
      %p193 = por %p191, %p192
      %p194 = scmp.ne.s32.totalorder %s185, %s186
      %p195 = scmp.eq.s32.totalorder %s28, 0
      %p196 = por %p194, %p195
      %p197 = scmp.ne.s32.totalorder %s185, %s186
      %p198 = scmp.eq.s32.totalorder %s29, 2
      %p199 = por %p197, %p198
      %p201 = scmp.ne.s32.totalorder %s186, %s200
      %p202 = scmp.eq.s32.totalorder %s29, 0
      %p203 = por %p201, %p202
      %s205 = sadd.s32 %s204, 1
      %p208 = scmp.eq.s32.totalorder %s23, 2
      %p209 = scmp.ne.s32.totalorder %s204, %s206
      %p210 = scmp.eq.s32.totalorder %s23, 0
      %p211 = por %p209, %p210
      %p212 = scmp.ne.s32.totalorder %s204, %s206
      %p213 = scmp.eq.s32.totalorder %s28, 2
      %p214 = por %p212, %p213
      %p215 = scmp.ne.s32.totalorder %s206, %s207
      %p216 = scmp.eq.s32.totalorder %s28, 0
      %p217 = por %p215, %p216
      %p218 = scmp.ne.s32.totalorder %s206, %s207
      %p219 = scmp.eq.s32.totalorder %s29, 2
      %p220 = por %p218, %p219
      %p222 = scmp.ne.s32.totalorder %s207, %s221
      %p223 = scmp.eq.s32.totalorder %s29, 0
      %p224 = por %p222, %p223
      %s226 = sadd.s32 %s225, 1
      %p229 = scmp.eq.s32.totalorder %s23, 2
      %p230 = scmp.ne.s32.totalorder %s225, %s227
      %p231 = scmp.eq.s32.totalorder %s23, 0
      %p232 = por %p230, %p231
      %p233 = scmp.ne.s32.totalorder %s225, %s227
      %p234 = scmp.eq.s32.totalorder %s28, 2
      %p235 = por %p233, %p234
      %p236 = scmp.ne.s32.totalorder %s227, %s228
      %p237 = scmp.eq.s32.totalorder %s28, 0
      %p238 = por %p236, %p237
      %p239 = scmp.ne.s32.totalorder %s227, %s228
      %p240 = scmp.eq.s32.totalorder %s29, 2
      %p241 = por %p239, %p240
      %p243 = scmp.ne.s32.totalorder %s228, %s242
      %p244 = scmp.eq.s32.totalorder %s29, 0
      %p245 = por %p243, %p244
      %s247 = sadd.s32 %s246, 1
      %p250 = scmp.eq.s32.totalorder %s23, 2
      %p251 = scmp.ne.s32.totalorder %s246, %s248
      %p252 = scmp.eq.s32.totalorder %s23, 0
      %p253 = por %p251, %p252
      %p254 = scmp.ne.s32.totalorder %s246, %s248
      %p255 = scmp.eq.s32.totalorder %s28, 2
      %p256 = por %p254, %p255
      %p257 = scmp.ne.s32.totalorder %s248, %s249
      %p258 = scmp.eq.s32.totalorder %s28, 0
      %p259 = por %p257, %p258
      %p260 = scmp.ne.s32.totalorder %s248, %s249
      %p261 = scmp.eq.s32.totalorder %s29, 2
      %p262 = por %p260, %p261
      %p264 = scmp.ne.s32.totalorder %s249, %s263
      %p265 = scmp.eq.s32.totalorder %s29, 0
      %p266 = por %p264, %p265
      %s267 = ssub.s32 %s23, %s30
      %p268 = scmp.eq.s32.totalorder %s267, 0
      %s270 = sadd.s32 %s269, 1
      %s271 = scalar_select %p268, %s269, %s270
      %p274 = pneg %p268
      %p275 = scmp.eq.s32.totalorder %s23, 2
      %p276 = por %p274, %p275
      %p277 = scmp.ne.s32.totalorder %s269, %s272
      %p278 = scmp.eq.s32.totalorder %s23, 0
      %p279 = por %p277, %p278
      %p280 = scmp.ne.s32.totalorder %s269, %s272
      %p281 = scmp.eq.s32.totalorder %s28, 2
      %p282 = por %p280, %p281
      %p283 = scmp.ne.s32.totalorder %s272, %s273
      %p284 = scmp.eq.s32.totalorder %s28, 0
      %p285 = por %p283, %p284
      %p286 = scmp.ne.s32.totalorder %s272, %s273
      %p287 = scmp.eq.s32.totalorder %s29, 2
      %p288 = por %p286, %p287
      %p290 = scmp.ne.s32.totalorder %s273, %s289
      %p291 = scmp.eq.s32.totalorder %s29, 0
      %p292 = por %p290, %p291
      %p293 = scmp.le.s32.totalorder 1, %s23
      %p294 = scmp.lt.s32.totalorder %s23, 4
      %p295 = pnand %p293, %p294
      %p296 = pneg %p295
      // Predicated region
      $region9: #{tpu_custom_call.1} parent=5 // pred_check
        _
      $region10: #{tpu_custom_call.1} parent=5 // pred_check_branch
        %298 = sbr.rel (%p295) target = $region12
      $region11: #{tpu_custom_call.1} parent=5 // pred_region
        %s299 = ssub.s32 %s23, 1
        // Predicated region
        $region13: #{tpu_custom_call.1} parent=11 // pred_check
          %p300 = pneg %p70
        $region14: #{tpu_custom_call.1} parent=11 // pred_check_branch
          %302 = sbr.rel (%p300) target = $region16
        $region15: #{tpu_custom_call.1} parent=11 // pred_region
          %s304 = ssub.s32 1024, 1024
          %305 = vsyncadd [#allocation3], %s304
          %s306 = sshll.u32 [#allocation2], 4
          %s307 = int_to_ptr.vmem [resolvable:$true] %s306
          %312 = dma.hbm_to_vmem [thread:$0]  %s1, 1024, %s307, [#allocation3], 256, 256, 16
        $region16: #{tpu_custom_call.1} parent=11 // pred_fallthru
          _
        // Predicated region
        $region17: #{tpu_custom_call.1} parent=11 // pred_check
          %p313 = pneg %p91
        $region18: #{tpu_custom_call.1} parent=11 // pred_check_branch
          %315 = sbr.rel (%p313) target = $region20
        $region19: #{tpu_custom_call.1} parent=11 // pred_region
          _
        $region20: #{tpu_custom_call.1} parent=11 // pred_fallthru
          _
        // Predicated region
        $region21: #{tpu_custom_call.1} parent=11 // pred_check
          %p316 = pneg %p112
        $region22: #{tpu_custom_call.1} parent=11 // pred_check_branch
          %318 = sbr.rel (%p316) target = $region24
        $region23: #{tpu_custom_call.1} parent=11 // pred_region
          %s320 = ssub.s32 4096, 4096
          %321 = vsyncadd [#allocation6], %s320
          %s322 = sshll.u32 [#allocation5], 4
          %s323 = int_to_ptr.vmem [resolvable:$true] %s322
          %328 = dma.hbm_to_vmem [thread:$0]  %s3, 4096, %s323, [#allocation6], 128, 128, 8
        $region24: #{tpu_custom_call.1} parent=11 // pred_fallthru
          _
        // Predicated region
        $region25: #{tpu_custom_call.1} parent=11 // pred_check
          %p329 = pneg %p133
        $region26: #{tpu_custom_call.1} parent=11 // pred_check_branch
          %331 = sbr.rel (%p329) target = $region28
        $region27: #{tpu_custom_call.1} parent=11 // pred_region
          _
        $region28: #{tpu_custom_call.1} parent=11 // pred_fallthru
          _
        // Predicated region
        $region29: #{tpu_custom_call.1} parent=11 // pred_check
          %p332 = pneg %p154
        $region30: #{tpu_custom_call.1} parent=11 // pred_check_branch
          %334 = sbr.rel (%p332) target = $region32
        $region31: #{tpu_custom_call.1} parent=11 // pred_region
          _
        $region32: #{tpu_custom_call.1} parent=11 // pred_fallthru
          _
        // Predicated region
        $region33: #{tpu_custom_call.1} parent=11 // pred_check
          %p335 = pneg %p175
        $region34: #{tpu_custom_call.1} parent=11 // pred_check_branch
          %337 = sbr.rel (%p335) target = $region36
        $region35: #{tpu_custom_call.1} parent=11 // pred_region
          _
        $region36: #{tpu_custom_call.1} parent=11 // pred_fallthru
          _
        // Predicated region
        $region37: #{tpu_custom_call.1} parent=11 // pred_check
          %p338 = pneg %p196
        $region38: #{tpu_custom_call.1} parent=11 // pred_check_branch
          %340 = sbr.rel (%p338) target = $region40
        $region39: #{tpu_custom_call.1} parent=11 // pred_region
          %s342 = ssub.s32 2048, 2048
          %343 = vsyncadd [#allocation6], %s342
          %s344 = sshll.u32 [#allocation7], 4
          %s345 = int_to_ptr.vmem [resolvable:$true] %s344
          %350 = dma.hbm_to_vmem [thread:$0]  %s7, 2048, %s345, [#allocation6], 128, 128, 8
        $region40: #{tpu_custom_call.1} parent=11 // pred_fallthru
          _
        // Predicated region
        $region41: #{tpu_custom_call.1} parent=11 // pred_check
          %p351 = pneg %p217
        $region42: #{tpu_custom_call.1} parent=11 // pred_check_branch
          %353 = sbr.rel (%p351) target = $region44
        $region43: #{tpu_custom_call.1} parent=11 // pred_region
          _
        $region44: #{tpu_custom_call.1} parent=11 // pred_fallthru
          _
        // Predicated region
        $region45: #{tpu_custom_call.1} parent=11 // pred_check
          %p354 = pneg %p238
        $region46: #{tpu_custom_call.1} parent=11 // pred_check_branch
          %356 = sbr.rel (%p354) target = $region48
        $region47: #{tpu_custom_call.1} parent=11 // pred_region
          %s358 = ssub.s32 2048, 2048
          %359 = vsyncadd [#allocation9], %s358
          %s360 = sshll.u32 [#allocation8], 4
          %s361 = int_to_ptr.vmem [resolvable:$true] %s360
          %366 = dma.hbm_to_vmem [thread:$0]  %s9, 2048, %s361, [#allocation9], 128, 128, 8
        $region48: #{tpu_custom_call.1} parent=11 // pred_fallthru
          _
        // Predicated region
        $region49: #{tpu_custom_call.1} parent=11 // pred_check
          %p367 = pneg %p259
        $region50: #{tpu_custom_call.1} parent=11 // pred_check_branch
          %369 = sbr.rel (%p367) target = $region52
        $region51: #{tpu_custom_call.1} parent=11 // pred_region
          _
        $region52: #{tpu_custom_call.1} parent=11 // pred_fallthru
          _
      $region12: #{tpu_custom_call.1} parent=5 // pred_fallthru
        _
      %p370 = scmp.lt.s32.totalorder %s23, 3
      // Predicated region
      $region53: #{tpu_custom_call.1} parent=5 // pred_check
        %p371 = pneg %p370
      $region54: #{tpu_custom_call.1} parent=5 // pred_check_branch
        %373 = sbr.rel (%p371) target = $region56
      $region55: #{tpu_custom_call.1} parent=5 // pred_region
        // Predicated region
        $region57: #{tpu_custom_call.1} parent=55 // pred_check
          %p374 = pneg %p43
        $region58: #{tpu_custom_call.1} parent=55 // pred_check_branch
          %376 = sbr.rel (%p374) target = $region60
        $region59: #{tpu_custom_call.1} parent=55 // pred_region
          %s377 = smul.u32 4, %s23
          %p378 = scmp.lt.s32.totalorder %s377, 11
          %s379 = scalar_select %p378, %s377, 11
          %s380 = smul.addr %s379, 8
          %s381 = scalar_lea.vmem %s0, %s380
          %s382 = smul.u32 4, %s23
        $region60: #{tpu_custom_call.1} parent=55 // pred_fallthru
          _
      $region56: #{tpu_custom_call.1} parent=5 // pred_fallthru
        _
      %p383 = scmp.le.s32.totalorder 1, %s23
      %p384 = scmp.lt.s32.totalorder %s23, 4
      %p385 = pnand %p383, %p384
      %p386 = pneg %p385
      // Predicated region
      $region61: #{tpu_custom_call.1} parent=5 // pred_check
        _
      $region62: #{tpu_custom_call.1} parent=5 // pred_check_branch
        %388 = sbr.rel (%p385) target = $region64
      $region63: #{tpu_custom_call.1} parent=5 // pred_region
        %s389 = ssub.s32 %s23, 1
        // Predicated region
        $region65: #{tpu_custom_call.1} parent=63 // pred_check
          %p390 = pneg %p70
        $region66: #{tpu_custom_call.1} parent=63 // pred_check_branch
          %392 = sbr.rel (%p390) target = $region68
        $region67: #{tpu_custom_call.1} parent=63 // pred_region
          %393 = dma.done [#allocation3], 1024
        $region68: #{tpu_custom_call.1} parent=63 // pred_fallthru
          _
        // Predicated region
        $region69: #{tpu_custom_call.1} parent=63 // pred_check
          %p394 = pneg %p112
        $region70: #{tpu_custom_call.1} parent=63 // pred_check_branch
          %396 = sbr.rel (%p394) target = $region72
        $region71: #{tpu_custom_call.1} parent=63 // pred_region
          %397 = dma.done [#allocation6], 4096
        $region72: #{tpu_custom_call.1} parent=63 // pred_fallthru
          _
        // Predicated region
        $region73: #{tpu_custom_call.1} parent=63 // pred_check
          %p398 = pneg %p196
        $region74: #{tpu_custom_call.1} parent=63 // pred_check_branch
          %400 = sbr.rel (%p398) target = $region76
        $region75: #{tpu_custom_call.1} parent=63 // pred_region
          %401 = dma.done [#allocation6], 2048
        $region76: #{tpu_custom_call.1} parent=63 // pred_fallthru
          _
        // Predicated region
        $region77: #{tpu_custom_call.1} parent=63 // pred_check
          %p402 = pneg %p238
        $region78: #{tpu_custom_call.1} parent=63 // pred_check_branch
          %404 = sbr.rel (%p402) target = $region80
        $region79: #{tpu_custom_call.1} parent=63 // pred_region
          %405 = dma.done [#allocation9], 2048
        $region80: #{tpu_custom_call.1} parent=63 // pred_fallthru
          _
        %s406 = smul.u32 4, %s28
        %p407 = scmp.lt.s32.totalorder %s406, 11
        %s408 = scalar_select %p407, %s406, 11
        %s409 = smul.addr %s408, 8
        %s410 = scalar_lea.vmem %s0, %s409
        %p411 = pneg %p49
        %p412 = pneg %p46
        %p413 = pneg %p70
        %p414 = pneg %p67
        %p415 = pneg %p91
        %p416 = pneg %p88
        %p417 = pneg %p112
        %p418 = pneg %p109
        %p419 = pneg %p133
        %p420 = pneg %p130
        %p421 = pneg %p154
        %p422 = pneg %p151
        %p423 = pneg %p175
        %p424 = pneg %p172
        %p425 = pneg %p196
        %p426 = pneg %p193
        %p427 = pneg %p217
        %p428 = pneg %p214
        %p429 = pneg %p238
        %p430 = pneg %p235
        %p431 = pneg %p259
        %p432 = pneg %p256
        %p433 = pneg %p285
        %p434 = pneg %p282
        %s435 = sand.u32 %s272, 1
        %s436 = scalar_lea.sflag [#allocation4], %s435
        %s437 = sand.u32 %s272, 1
        %s438 = smul.addr %s437, 32
        %s439 = scalar_lea.vmem [#allocation10], %s438
        %s440 = smul.u32 4, %s28
        %p441 = scmp.lt.s32.totalorder %s440, 11
        %s442 = scalar_select %p441, %s440, 11
        %s443 = smul.addr %s442, 8
        %s444 = scalar_lea.vmem %s0, %s443
        %s445 = smul.u32 4, %s28
        %s446 = smul.u32 4, %s28
        %v447 = vld [vmem:[%s444] sm:$0xff]
        %v448 = vld [vmem:[%s444 + $0x8] sm:$0xff]
        %v449 = vld [vmem:[%s444 + $0x10] sm:$0xff]
        %v450 = vld [vmem:[%s444 + $0x18] sm:$0xff]
        %v451 = vld [vmem:[#allocation2] sm:$0xff]
        %v452 = vld [vmem:[#allocation2 + $0x8] sm:$0xff]
        %v453 = vld [vmem:[#allocation2 + $0x10] sm:$0xff]
        %v454 = vld [vmem:[#allocation2 + $0x18] sm:$0xff]
        %v455 = vld [vmem:[#allocation2 + $0x20] sm:$0xff]
        %v456 = vld [vmem:[#allocation2 + $0x28] sm:$0xff]
        %v457 = vld [vmem:[#allocation2 + $0x30] sm:$0xff]
        %v458 = vld [vmem:[#allocation2 + $0x38] sm:$0xff]
        %v459 = vld [vmem:[%s2] sm:$0x3]
        %v461 = vlaneseq
        %v462 = vshrl.u32 %v461, 7
        %v463 = vsub.s32 0, %v462
        %v464 = vrot.slane %v459, %v463
        %v465 = vlaneseq
        %v466 = vshrl.u32 %v465, 7
        %v467 = vsub.s32 1, %v466
        %v468 = vrot.slane %v459, %v467
        %vm471 = vcmask 261120
        %v473 = vsel %vm471, %v447, 0
        %v476 = vsel %vm471, %v448, 0
        %v479 = vsel %vm471, %v449, 0
        %v482 = vsel %vm471, %v450, 0
        %484 = vmatprep.subr.mxu0 0.0
        %485 = vmatpush1.msra.mxu0 0.0
        %486 = vmatprep.subr.mxu0 0.0
        %487 = vmatpush1.msra.mxu0 0.0
        %488 = vmatprep.subr.mxu0 0.0
        %489 = vmatpush1.msra.mxu0 0.0
        %490 = vmatprep.subr.mxu0 0.0
        %491 = vmatpush1.msra.mxu0 0.0
        %492 = vmatprep.subr.mxu0 0.0
        %493 = vmatpush1.msra.mxu0 0.0
        %494 = vmatprep.subr.mxu0 0.0
        %495 = vmatpush1.msra.mxu0 0.0
        %496 = vmatprep.subr.mxu0 0.0
        %497 = vmatpush1.msra.mxu0 0.0
        %498 = vmatprep.subr.mxu0 0.0
        %499 = vmatpush1.msra.mxu0 0.0
        %500 = vmatprep.subr.mxu0 0.0
        %501 = vmatpush1.msra.mxu0 0.0
        %502 = vmatprep.subr.mxu0 0.0
        %503 = vmatpush1.msra.mxu0 0.0
        %504 = vmatprep.subr.mxu0 0.0
        %505 = vmatpush1.msra.mxu0 0.0
        %506 = vmatprep.subr.mxu0 0.0
        %507 = vmatpush1.msra.mxu0 0.0
        %508 = vmatprep.subr.mxu0 %v458
        %509 = vmatpush1.msra.mxu0 %v457
        %510 = vmatprep.subr.mxu0 %v456
        %511 = vmatpush1.msra.mxu0 %v455
        %512 = vmatprep.subr.mxu0 %v454
        %513 = vmatpush1.msra.mxu0 %v453
        %514 = vmatprep.subr.mxu0 %v452
        %515 = vmatpush1.msra.mxu0 %v451
        %516 = vmatprep.subr.mxu0 0.0
        %517 = vmatpush2.msra.mxu0 0.0
        %518 = vmatprep.subr.mxu0 0.0
        %519 = vmatpush2.msra.mxu0 0.0
        %520 = vmatprep.subr.mxu0 0.0
        %521 = vmatpush2.msra.mxu0 0.0
        %522 = vmatprep.subr.mxu0 0.0
        %523 = vmatpush2.msra.mxu0 0.0
        %524 = vmatprep.subr.mxu0 0.0
        %525 = vmatpush2.msra.mxu0 0.0
        %526 = vmatprep.subr.mxu0 0.0
        %527 = vmatpush2.msra.mxu0 0.0
        %528 = vmatprep.subr.mxu0 0.0
        %529 = vmatpush2.msra.mxu0 0.0
        %530 = vmatprep.subr.mxu0 0.0
        %531 = vmatpush2.msra.mxu0 0.0
        %532 = vmatprep.subr.mxu0 0.0
        %533 = vmatpush2.msra.mxu0 0.0
        %534 = vmatprep.subr.mxu0 0.0
        %535 = vmatpush2.msra.mxu0 0.0
        %536 = vmatprep.subr.mxu0 0.0
        %537 = vmatpush2.msra.mxu0 0.0
        %538 = vmatprep.subr.mxu0 0.0
        %539 = vmatpush2.msra.mxu0 0.0
        %540 = vmatprep.subr.mxu0 0.0
        %541 = vmatpush2.msra.mxu0 0.0
        %542 = vmatprep.subr.mxu0 0.0
        %543 = vmatpush2.msra.mxu0 0.0
        %544 = vmatprep.subr.mxu0 0.0
        %545 = vmatpush2.msra.mxu0 0.0
        %546 = vmatprep.subr.mxu0 0.0
        %547 = vmatpush2.msra.mxu0 0.0
        %548 = vmatprep.mubr.f32.mxu0 0.0
        %549 = vmatmul.mubr.f32.gmra.mxu0 %v473
        %v550 = vpop.f32.mrf.mxu0
        %v551 = vadd.f32 %v464, %v550
        %v552 = vpop.f32.mrf.mxu0
        %v553 = vadd.f32 %v468, %v552
        %554 = vmatprep.mubr.f32.mxu0 0.0
        %555 = vmatmul.mubr.f32.gmra.mxu0 %v476
        %v556 = vpop.f32.mrf.mxu0
        %v557 = vadd.f32 %v464, %v556
        %v558 = vpop.f32.mrf.mxu0
        %v559 = vadd.f32 %v468, %v558
        %560 = vmatprep.mubr.f32.mxu0 0.0
        %561 = vmatmul.mubr.f32.gmra.mxu0 %v479
        %v562 = vpop.f32.mrf.mxu0
        %v563 = vadd.f32 %v464, %v562
        %v564 = vpop.f32.mrf.mxu0
        %v565 = vadd.f32 %v468, %v564
        %566 = vmatprep.mubr.f32.mxu0 0.0
        %567 = vmatmul.mubr.f32.gmra.mxu0 %v482
        %v568 = vpop.f32.mrf.mxu0
        %v569 = vadd.f32 %v464, %v568
        %v570 = vpop.f32.mrf.mxu0
        %v571 = vadd.f32 %v468, %v570
        %572 = vdwg.mxu0
        %v573 = vmax.f32 %v551, 0.0
        %v574 = vmax.f32 %v553, 0.0
        %v575 = vmax.f32 %v557, 0.0
        %v576 = vmax.f32 %v559, 0.0
        %v577 = vmax.f32 %v563, 0.0
        %v578 = vmax.f32 %v565, 0.0
        %v579 = vmax.f32 %v569, 0.0
        %v580 = vmax.f32 %v571, 0.0
        %v581 = vld [vmem:[#allocation5] sm:$0xff]
        %v582 = vld [vmem:[#allocation5 + $0x8] sm:$0xff]
        %v583 = vld [vmem:[#allocation5 + $0x10] sm:$0xff]
        %v584 = vld [vmem:[#allocation5 + $0x18] sm:$0xff]
        %v585 = vld [vmem:[#allocation5 + $0x20] sm:$0xff]
        %v586 = vld [vmem:[#allocation5 + $0x28] sm:$0xff]
        %v587 = vld [vmem:[#allocation5 + $0x30] sm:$0xff]
        %v588 = vld [vmem:[#allocation5 + $0x38] sm:$0xff]
        %v589 = vld [vmem:[#allocation5 + $0x40] sm:$0xff]
        %v590 = vld [vmem:[#allocation5 + $0x48] sm:$0xff]
        %v591 = vld [vmem:[#allocation5 + $0x50] sm:$0xff]
        %v592 = vld [vmem:[#allocation5 + $0x58] sm:$0xff]
        %v593 = vld [vmem:[#allocation5 + $0x60] sm:$0xff]
        %v594 = vld [vmem:[#allocation5 + $0x68] sm:$0xff]
        %v595 = vld [vmem:[#allocation5 + $0x70] sm:$0xff]
        %v596 = vld [vmem:[#allocation5 + $0x78] sm:$0xff]
        %v597 = vld [vmem:[#allocation5 + $0x80] sm:$0xff]
        %v598 = vld [vmem:[#allocation5 + $0x88] sm:$0xff]
        %v599 = vld [vmem:[#allocation5 + $0x90] sm:$0xff]
        %v600 = vld [vmem:[#allocation5 + $0x98] sm:$0xff]
        %v601 = vld [vmem:[#allocation5 + $0xa0] sm:$0xff]
        %v602 = vld [vmem:[#allocation5 + $0xa8] sm:$0xff]
        %v603 = vld [vmem:[#allocation5 + $0xb0] sm:$0xff]
        %v604 = vld [vmem:[#allocation5 + $0xb8] sm:$0xff]
        %v605 = vld [vmem:[#allocation5 + $0xc0] sm:$0xff]
        %v606 = vld [vmem:[#allocation5 + $0xc8] sm:$0xff]
        %v607 = vld [vmem:[#allocation5 + $0xd0] sm:$0xff]
        %v608 = vld [vmem:[#allocation5 + $0xd8] sm:$0xff]
        %v609 = vld [vmem:[#allocation5 + $0xe0] sm:$0xff]
        %v610 = vld [vmem:[#allocation5 + $0xe8] sm:$0xff]
        %v611 = vld [vmem:[#allocation5 + $0xf0] sm:$0xff]
        %v612 = vld [vmem:[#allocation5 + $0xf8] sm:$0xff]
        %v613 = vld [vmem:[%s4] sm:$0x1]
        %v615 = vlaneseq
        %v616 = vshrl.u32 %v615, 7
        %v617 = vsub.s32 0, %v616
        %v618 = vrot.slane %v613, %v617
        %620 = vmatprep.subr.mxu0 0.0
        %621 = vmatpush1.msra.mxu0 %v596
        %622 = vmatprep.subr.mxu0 0.0
        %623 = vmatpush1.msra.mxu0 %v595
        %624 = vmatprep.subr.mxu0 0.0
        %625 = vmatpush1.msra.mxu0 %v594
        %626 = vmatprep.subr.mxu0 0.0
        %627 = vmatpush1.msra.mxu0 %v593
        %628 = vmatprep.subr.mxu0 0.0
        %629 = vmatpush1.msra.mxu0 %v592
        %630 = vmatprep.subr.mxu0 0.0
        %631 = vmatpush1.msra.mxu0 %v591
        %632 = vmatprep.subr.mxu0 0.0
        %633 = vmatpush1.msra.mxu0 %v590
        %634 = vmatprep.subr.mxu0 0.0
        %635 = vmatpush1.msra.mxu0 %v589
        %636 = vmatprep.subr.mxu0 0.0
        %637 = vmatpush1.msra.mxu0 %v588
        %638 = vmatprep.subr.mxu0 0.0
        %639 = vmatpush1.msra.mxu0 %v587
        %640 = vmatprep.subr.mxu0 0.0
        %641 = vmatpush1.msra.mxu0 %v586
        %642 = vmatprep.subr.mxu0 0.0
        %643 = vmatpush1.msra.mxu0 %v585
        %644 = vmatprep.subr.mxu0 0.0
        %645 = vmatpush1.msra.mxu0 %v584
        %646 = vmatprep.subr.mxu0 0.0
        %647 = vmatpush1.msra.mxu0 %v583
        %648 = vmatprep.subr.mxu0 0.0
        %649 = vmatpush1.msra.mxu0 %v582
        %650 = vmatprep.subr.mxu0 0.0
        %651 = vmatpush1.msra.mxu0 %v581
        %652 = vmatprep.subr.mxu0 0.0
        %653 = vmatpush2.msra.mxu0 %v612
        %654 = vmatprep.subr.mxu0 0.0
        %655 = vmatpush2.msra.mxu0 %v611
        %656 = vmatprep.subr.mxu0 0.0
        %657 = vmatpush2.msra.mxu0 %v610
        %658 = vmatprep.subr.mxu0 0.0
        %659 = vmatpush2.msra.mxu0 %v609
        %660 = vmatprep.subr.mxu0 0.0
        %661 = vmatpush2.msra.mxu0 %v608
        %662 = vmatprep.subr.mxu0 0.0
        %663 = vmatpush2.msra.mxu0 %v607
        %664 = vmatprep.subr.mxu0 0.0
        %665 = vmatpush2.msra.mxu0 %v606
        %666 = vmatprep.subr.mxu0 0.0
        %667 = vmatpush2.msra.mxu0 %v605
        %668 = vmatprep.subr.mxu0 0.0
        %669 = vmatpush2.msra.mxu0 %v604
        %670 = vmatprep.subr.mxu0 0.0
        %671 = vmatpush2.msra.mxu0 %v603
        %672 = vmatprep.subr.mxu0 0.0
        %673 = vmatpush2.msra.mxu0 %v602
        %674 = vmatprep.subr.mxu0 0.0
        %675 = vmatpush2.msra.mxu0 %v601
        %676 = vmatprep.subr.mxu0 0.0
        %677 = vmatpush2.msra.mxu0 %v600
        %678 = vmatprep.subr.mxu0 0.0
        %679 = vmatpush2.msra.mxu0 %v599
        %680 = vmatprep.subr.mxu0 0.0
        %681 = vmatpush2.msra.mxu0 %v598
        %682 = vmatprep.subr.mxu0 0.0
        %683 = vmatpush2.msra.mxu0 %v597
        %684 = vmatprep.mubr.f32.mxu0 %v574
        %685 = vmatmul.mubr.f32.gmra.mxu0 %v573
        %v686 = vpop.f32.mrf.mxu0
        %v687 = vadd.f32 %v618, %v686
        %v688 = vpop.f32.mrf.mxu0
        %689 = vmatprep.mubr.f32.mxu0 %v576
        %690 = vmatmul.mubr.f32.gmra.mxu0 %v575
        %v691 = vpop.f32.mrf.mxu0
        %v692 = vadd.f32 %v618, %v691
        %v693 = vpop.f32.mrf.mxu0
        %694 = vmatprep.mubr.f32.mxu0 %v578
        %695 = vmatmul.mubr.f32.gmra.mxu0 %v577
        %v696 = vpop.f32.mrf.mxu0
        %v697 = vadd.f32 %v618, %v696
        %v698 = vpop.f32.mrf.mxu0
        %699 = vmatprep.mubr.f32.mxu0 %v580
        %700 = vmatmul.mubr.f32.gmra.mxu0 %v579
        %v701 = vpop.f32.mrf.mxu0
        %v702 = vadd.f32 %v618, %v701
        %v703 = vpop.f32.mrf.mxu0
        %704 = vdwg.mxu0
        %v705 = vmax.f32 %v687, 0.0
        %v706 = vmax.f32 %v692, 0.0
        %v707 = vmax.f32 %v697, 0.0
        %v708 = vmax.f32 %v702, 0.0
        %v709 = vld [vmem:[%s5] sm:$0xff]
        %v710 = vld [vmem:[%s5 + $0x8] sm:$0xff]
        %v711 = vld [vmem:[%s5 + $0x10] sm:$0xff]
        %v712 = vld [vmem:[%s5 + $0x18] sm:$0xff]
        %v713 = vld [vmem:[%s5 + $0x20] sm:$0xff]
        %v714 = vld [vmem:[%s5 + $0x28] sm:$0xff]
        %v715 = vld [vmem:[%s5 + $0x30] sm:$0xff]
        %v716 = vld [vmem:[%s5 + $0x38] sm:$0xff]
        %v717 = vld [vmem:[%s5 + $0x40] sm:$0xff]
        %v718 = vld [vmem:[%s5 + $0x48] sm:$0xff]
        %v719 = vld [vmem:[%s5 + $0x50] sm:$0xff]
        %v720 = vld [vmem:[%s5 + $0x58] sm:$0xff]
        %v721 = vld [vmem:[%s5 + $0x60] sm:$0xff]
        %v722 = vld [vmem:[%s5 + $0x68] sm:$0xff]
        %v723 = vld [vmem:[%s5 + $0x70] sm:$0xff]
        %v724 = vld [vmem:[%s5 + $0x78] sm:$0xff]
        %v725 = vld [vmem:[%s6] sm:$0x1]
        %v727 = vlaneseq
        %v728 = vshrl.u32 %v727, 7
        %v729 = vsub.s32 0, %v728
        %v730 = vrot.slane %v725, %v729
        %732 = vmatprep.subr.mxu0 0.0
        %733 = vmatpush1.msra.mxu0 %v724
        %734 = vmatprep.subr.mxu0 0.0
        %735 = vmatpush1.msra.mxu0 %v723
        %736 = vmatprep.subr.mxu0 0.0
        %737 = vmatpush1.msra.mxu0 %v722
        %738 = vmatprep.subr.mxu0 0.0
        %739 = vmatpush1.msra.mxu0 %v721
        %740 = vmatprep.subr.mxu0 0.0
        %741 = vmatpush1.msra.mxu0 %v720
        %742 = vmatprep.subr.mxu0 0.0
        %743 = vmatpush1.msra.mxu0 %v719
        %744 = vmatprep.subr.mxu0 0.0
        %745 = vmatpush1.msra.mxu0 %v718
        %746 = vmatprep.subr.mxu0 0.0
        %747 = vmatpush1.msra.mxu0 %v717
        %748 = vmatprep.subr.mxu0 0.0
        %749 = vmatpush1.msra.mxu0 %v716
        %750 = vmatprep.subr.mxu0 0.0
        %751 = vmatpush1.msra.mxu0 %v715
        %752 = vmatprep.subr.mxu0 0.0
        %753 = vmatpush1.msra.mxu0 %v714
        %754 = vmatprep.subr.mxu0 0.0
        %755 = vmatpush1.msra.mxu0 %v713
        %756 = vmatprep.subr.mxu0 0.0
        %757 = vmatpush1.msra.mxu0 %v712
        %758 = vmatprep.subr.mxu0 0.0
        %759 = vmatpush1.msra.mxu0 %v711
        %760 = vmatprep.subr.mxu0 0.0
        %761 = vmatpush1.msra.mxu0 %v710
        %762 = vmatprep.subr.mxu0 0.0
        %763 = vmatpush1.msra.mxu0 %v709
        %764 = vmatprep.subr.mxu0 0.0
        %765 = vmatpush2.msra.mxu0 0.0
        %766 = vmatprep.subr.mxu0 0.0
        %767 = vmatpush2.msra.mxu0 0.0
        %768 = vmatprep.subr.mxu0 0.0
        %769 = vmatpush2.msra.mxu0 0.0
        %770 = vmatprep.subr.mxu0 0.0
        %771 = vmatpush2.msra.mxu0 0.0
        %772 = vmatprep.subr.mxu0 0.0
        %773 = vmatpush2.msra.mxu0 0.0
        %774 = vmatprep.subr.mxu0 0.0
        %775 = vmatpush2.msra.mxu0 0.0
        %776 = vmatprep.subr.mxu0 0.0
        %777 = vmatpush2.msra.mxu0 0.0
        %778 = vmatprep.subr.mxu0 0.0
        %779 = vmatpush2.msra.mxu0 0.0
        %780 = vmatprep.subr.mxu0 0.0
        %781 = vmatpush2.msra.mxu0 0.0
        %782 = vmatprep.subr.mxu0 0.0
        %783 = vmatpush2.msra.mxu0 0.0
        %784 = vmatprep.subr.mxu0 0.0
        %785 = vmatpush2.msra.mxu0 0.0
        %786 = vmatprep.subr.mxu0 0.0
        %787 = vmatpush2.msra.mxu0 0.0
        %788 = vmatprep.subr.mxu0 0.0
        %789 = vmatpush2.msra.mxu0 0.0
        %790 = vmatprep.subr.mxu0 0.0
        %791 = vmatpush2.msra.mxu0 0.0
        %792 = vmatprep.subr.mxu0 0.0
        %793 = vmatpush2.msra.mxu0 0.0
        %794 = vmatprep.subr.mxu0 0.0
        %795 = vmatpush2.msra.mxu0 0.0
        %796 = vmatprep.mubr.f32.mxu0 0.0
        %797 = vmatmul.mubr.f32.gmra.mxu0 %v705
        %v798 = vpop.f32.mrf.mxu0
        %v799 = vadd.f32 %v730, %v798
        %v800 = vpop.f32.mrf.mxu0
        %801 = vmatprep.mubr.f32.mxu0 0.0
        %802 = vmatmul.mubr.f32.gmra.mxu0 %v706
        %v803 = vpop.f32.mrf.mxu0
        %v804 = vadd.f32 %v730, %v803
        %v805 = vpop.f32.mrf.mxu0
        %806 = vmatprep.mubr.f32.mxu0 0.0
        %807 = vmatmul.mubr.f32.gmra.mxu0 %v707
        %v808 = vpop.f32.mrf.mxu0
        %v809 = vadd.f32 %v730, %v808
        %v810 = vpop.f32.mrf.mxu0
        %811 = vmatprep.mubr.f32.mxu0 0.0
        %812 = vmatmul.mubr.f32.gmra.mxu0 %v708
        %v813 = vpop.f32.mrf.mxu0
        %v814 = vadd.f32 %v730, %v813
        %v815 = vpop.f32.mrf.mxu0
        %816 = vdwg.mxu0
        %v817 = vmax.f32 %v799, 0.0
        %v818 = vmax.f32 %v804, 0.0
        %v819 = vmax.f32 %v809, 0.0
        %v820 = vmax.f32 %v814, 0.0
        %v821 = vld [vmem:[#allocation7] sm:$0xff]
        %v822 = vld [vmem:[#allocation7 + $0x8] sm:$0xff]
        %v823 = vld [vmem:[#allocation7 + $0x10] sm:$0xff]
        %v824 = vld [vmem:[#allocation7 + $0x18] sm:$0xff]
        %v825 = vld [vmem:[#allocation7 + $0x20] sm:$0xff]
        %v826 = vld [vmem:[#allocation7 + $0x28] sm:$0xff]
        %v827 = vld [vmem:[#allocation7 + $0x30] sm:$0xff]
        %v828 = vld [vmem:[#allocation7 + $0x38] sm:$0xff]
        %v829 = vld [vmem:[#allocation7 + $0x40] sm:$0xff]
        %v830 = vld [vmem:[#allocation7 + $0x48] sm:$0xff]
        %v831 = vld [vmem:[#allocation7 + $0x50] sm:$0xff]
        %v832 = vld [vmem:[#allocation7 + $0x58] sm:$0xff]
        %v833 = vld [vmem:[#allocation7 + $0x60] sm:$0xff]
        %v834 = vld [vmem:[#allocation7 + $0x68] sm:$0xff]
        %v835 = vld [vmem:[#allocation7 + $0x70] sm:$0xff]
        %v836 = vld [vmem:[#allocation7 + $0x78] sm:$0xff]
        %v837 = vld [vmem:[%s8] sm:$0x1]
        %v839 = vlaneseq
        %v840 = vshrl.u32 %v839, 7
        %v841 = vsub.s32 0, %v840
        %v842 = vrot.slane %v837, %v841
        %844 = vmatprep.subr.mxu0 0.0
        %845 = vmatpush1.msra.mxu0 %v836
        %846 = vmatprep.subr.mxu0 0.0
        %847 = vmatpush1.msra.mxu0 %v835
        %848 = vmatprep.subr.mxu0 0.0
        %849 = vmatpush1.msra.mxu0 %v834
        %850 = vmatprep.subr.mxu0 0.0
        %851 = vmatpush1.msra.mxu0 %v833
        %852 = vmatprep.subr.mxu0 0.0
        %853 = vmatpush1.msra.mxu0 %v832
        %854 = vmatprep.subr.mxu0 0.0
        %855 = vmatpush1.msra.mxu0 %v831
        %856 = vmatprep.subr.mxu0 0.0
        %857 = vmatpush1.msra.mxu0 %v830
        %858 = vmatprep.subr.mxu0 0.0
        %859 = vmatpush1.msra.mxu0 %v829
        %860 = vmatprep.subr.mxu0 0.0
        %861 = vmatpush1.msra.mxu0 %v828
        %862 = vmatprep.subr.mxu0 0.0
        %863 = vmatpush1.msra.mxu0 %v827
        %864 = vmatprep.subr.mxu0 0.0
        %865 = vmatpush1.msra.mxu0 %v826
        %866 = vmatprep.subr.mxu0 0.0
        %867 = vmatpush1.msra.mxu0 %v825
        %868 = vmatprep.subr.mxu0 0.0
        %869 = vmatpush1.msra.mxu0 %v824
        %870 = vmatprep.subr.mxu0 0.0
        %871 = vmatpush1.msra.mxu0 %v823
        %872 = vmatprep.subr.mxu0 0.0
        %873 = vmatpush1.msra.mxu0 %v822
        %874 = vmatprep.subr.mxu0 0.0
        %875 = vmatpush1.msra.mxu0 %v821
        %876 = vmatprep.subr.mxu0 0.0
        %877 = vmatpush2.msra.mxu0 0.0
        %878 = vmatprep.subr.mxu0 0.0
        %879 = vmatpush2.msra.mxu0 0.0
        %880 = vmatprep.subr.mxu0 0.0
        %881 = vmatpush2.msra.mxu0 0.0
        %882 = vmatprep.subr.mxu0 0.0
        %883 = vmatpush2.msra.mxu0 0.0
        %884 = vmatprep.subr.mxu0 0.0
        %885 = vmatpush2.msra.mxu0 0.0
        %886 = vmatprep.subr.mxu0 0.0
        %887 = vmatpush2.msra.mxu0 0.0
        %888 = vmatprep.subr.mxu0 0.0
        %889 = vmatpush2.msra.mxu0 0.0
        %890 = vmatprep.subr.mxu0 0.0
        %891 = vmatpush2.msra.mxu0 0.0
        %892 = vmatprep.subr.mxu0 0.0
        %893 = vmatpush2.msra.mxu0 0.0
        %894 = vmatprep.subr.mxu0 0.0
        %895 = vmatpush2.msra.mxu0 0.0
        %896 = vmatprep.subr.mxu0 0.0
        %897 = vmatpush2.msra.mxu0 0.0
        %898 = vmatprep.subr.mxu0 0.0
        %899 = vmatpush2.msra.mxu0 0.0
        %900 = vmatprep.subr.mxu0 0.0
        %901 = vmatpush2.msra.mxu0 0.0
        %902 = vmatprep.subr.mxu0 0.0
        %903 = vmatpush2.msra.mxu0 0.0
        %904 = vmatprep.subr.mxu0 0.0
        %905 = vmatpush2.msra.mxu0 0.0
        %906 = vmatprep.subr.mxu0 0.0
        %907 = vmatpush2.msra.mxu0 0.0
        %908 = vmatprep.mubr.f32.mxu0 0.0
        %909 = vmatmul.mubr.f32.gmra.mxu0 %v817
        %v910 = vpop.f32.mrf.mxu0
        %v911 = vadd.f32 %v842, %v910
        %v912 = vpop.f32.mrf.mxu0
        %913 = vmatprep.mubr.f32.mxu0 0.0
        %914 = vmatmul.mubr.f32.gmra.mxu0 %v818
        %v915 = vpop.f32.mrf.mxu0
        %v916 = vadd.f32 %v842, %v915
        %v917 = vpop.f32.mrf.mxu0
        %918 = vmatprep.mubr.f32.mxu0 0.0
        %919 = vmatmul.mubr.f32.gmra.mxu0 %v819
        %v920 = vpop.f32.mrf.mxu0
        %v921 = vadd.f32 %v842, %v920
        %v922 = vpop.f32.mrf.mxu0
        %923 = vmatprep.mubr.f32.mxu0 0.0
        %924 = vmatmul.mubr.f32.gmra.mxu0 %v820
        %v925 = vpop.f32.mrf.mxu0
        %v926 = vadd.f32 %v842, %v925
        %v927 = vpop.f32.mrf.mxu0
        %928 = vdwg.mxu0
        %v929 = vmax.f32 %v911, 0.0
        %v930 = vmax.f32 %v916, 0.0
        %v931 = vmax.f32 %v921, 0.0
        %v932 = vmax.f32 %v926, 0.0
        %v933 = vld [vmem:[#allocation8] sm:$0xff]
        %v934 = vld [vmem:[#allocation8 + $0x8] sm:$0xff]
        %v935 = vld [vmem:[#allocation8 + $0x10] sm:$0xff]
        %v936 = vld [vmem:[#allocation8 + $0x18] sm:$0xff]
        %v937 = vld [vmem:[#allocation8 + $0x20] sm:$0xff]
        %v938 = vld [vmem:[#allocation8 + $0x28] sm:$0xff]
        %v939 = vld [vmem:[#allocation8 + $0x30] sm:$0xff]
        %v940 = vld [vmem:[#allocation8 + $0x38] sm:$0xff]
        %v941 = vld [vmem:[#allocation8 + $0x40] sm:$0xff]
        %v942 = vld [vmem:[#allocation8 + $0x48] sm:$0xff]
        %v943 = vld [vmem:[#allocation8 + $0x50] sm:$0xff]
        %v944 = vld [vmem:[#allocation8 + $0x58] sm:$0xff]
        %v945 = vld [vmem:[#allocation8 + $0x60] sm:$0xff]
        %v946 = vld [vmem:[#allocation8 + $0x68] sm:$0xff]
        %v947 = vld [vmem:[#allocation8 + $0x70] sm:$0xff]
        %v948 = vld [vmem:[#allocation8 + $0x78] sm:$0xff]
        %v949 = vld [vmem:[%s10] sm:$0x1]
        %v951 = vlaneseq
        %v952 = vshrl.u32 %v951, 7
        %v953 = vsub.s32 0, %v952
        %v954 = vrot.slane %v949, %v953
        %956 = vmatprep.subr.mxu0 0.0
        %957 = vmatpush1.msra.mxu0 %v948
        %958 = vmatprep.subr.mxu0 0.0
        %959 = vmatpush1.msra.mxu0 %v947
        %960 = vmatprep.subr.mxu0 0.0
        %961 = vmatpush1.msra.mxu0 %v946
        %962 = vmatprep.subr.mxu0 0.0
        %963 = vmatpush1.msra.mxu0 %v945
        %964 = vmatprep.subr.mxu0 0.0
        %965 = vmatpush1.msra.mxu0 %v944
        %966 = vmatprep.subr.mxu0 0.0
        %967 = vmatpush1.msra.mxu0 %v943
        %968 = vmatprep.subr.mxu0 0.0
        %969 = vmatpush1.msra.mxu0 %v942
        %970 = vmatprep.subr.mxu0 0.0
        %971 = vmatpush1.msra.mxu0 %v941
        %972 = vmatprep.subr.mxu0 0.0
        %973 = vmatpush1.msra.mxu0 %v940
        %974 = vmatprep.subr.mxu0 0.0
        %975 = vmatpush1.msra.mxu0 %v939
        %976 = vmatprep.subr.mxu0 0.0
        %977 = vmatpush1.msra.mxu0 %v938
        %978 = vmatprep.subr.mxu0 0.0
        %979 = vmatpush1.msra.mxu0 %v937
        %980 = vmatprep.subr.mxu0 0.0
        %981 = vmatpush1.msra.mxu0 %v936
        %982 = vmatprep.subr.mxu0 0.0
        %983 = vmatpush1.msra.mxu0 %v935
        %984 = vmatprep.subr.mxu0 0.0
        %985 = vmatpush1.msra.mxu0 %v934
        %986 = vmatprep.subr.mxu0 0.0
        %987 = vmatpush1.msra.mxu0 %v933
        %988 = vmatprep.subr.mxu0 0.0
        %989 = vmatpush2.msra.mxu0 0.0
        %990 = vmatprep.subr.mxu0 0.0
        %991 = vmatpush2.msra.mxu0 0.0
        %992 = vmatprep.subr.mxu0 0.0
        %993 = vmatpush2.msra.mxu0 0.0
        %994 = vmatprep.subr.mxu0 0.0
        %995 = vmatpush2.msra.mxu0 0.0
        %996 = vmatprep.subr.mxu0 0.0
        %997 = vmatpush2.msra.mxu0 0.0
        %998 = vmatprep.subr.mxu0 0.0
        %999 = vmatpush2.msra.mxu0 0.0
        %1000 = vmatprep.subr.mxu0 0.0
        %1001 = vmatpush2.msra.mxu0 0.0
        %1002 = vmatprep.subr.mxu0 0.0
        %1003 = vmatpush2.msra.mxu0 0.0
        %1004 = vmatprep.subr.mxu0 0.0
        %1005 = vmatpush2.msra.mxu0 0.0
        %1006 = vmatprep.subr.mxu0 0.0
        %1007 = vmatpush2.msra.mxu0 0.0
        %1008 = vmatprep.subr.mxu0 0.0
        %1009 = vmatpush2.msra.mxu0 0.0
        %1010 = vmatprep.subr.mxu0 0.0
        %1011 = vmatpush2.msra.mxu0 0.0
        %1012 = vmatprep.subr.mxu0 0.0
        %1013 = vmatpush2.msra.mxu0 0.0
        %1014 = vmatprep.subr.mxu0 0.0
        %1015 = vmatpush2.msra.mxu0 0.0
        %1016 = vmatprep.subr.mxu0 0.0
        %1017 = vmatpush2.msra.mxu0 0.0
        %1018 = vmatprep.subr.mxu0 0.0
        %1019 = vmatpush2.msra.mxu0 0.0
        %1020 = vmatprep.mubr.f32.mxu0 0.0
        %1021 = vmatmul.mubr.f32.gmra.mxu0 %v929
        %v1022 = vpop.f32.mrf.mxu0
        %v1023 = vadd.f32 %v954, %v1022
        %v1024 = vpop.f32.mrf.mxu0
        %1025 = vmatprep.mubr.f32.mxu0 0.0
        %1026 = vmatmul.mubr.f32.gmra.mxu0 %v930
        %v1027 = vpop.f32.mrf.mxu0
        %v1028 = vadd.f32 %v954, %v1027
        %v1029 = vpop.f32.mrf.mxu0
        %1030 = vmatprep.mubr.f32.mxu0 0.0
        %1031 = vmatmul.mubr.f32.gmra.mxu0 %v931
        %v1032 = vpop.f32.mrf.mxu0
        %v1033 = vadd.f32 %v954, %v1032
        %v1034 = vpop.f32.mrf.mxu0
        %1035 = vmatprep.mubr.f32.mxu0 0.0
        %1036 = vmatmul.mubr.f32.gmra.mxu0 %v932
        %v1037 = vpop.f32.mrf.mxu0
        %v1038 = vadd.f32 %v954, %v1037
        %v1039 = vpop.f32.mrf.mxu0
        %1040 = vdwg.mxu0
        %v1041 = vsub.f32 0.0, %v1023
        %v1042 = vsub.f32 0.0, %v1028
        %v1043 = vsub.f32 0.0, %v1033
        %v1044 = vsub.f32 0.0, %v1038
        %v1045 = vmul.f32 %v1041, 1.442695
        %v1046 = vpow.pop %v1045
        %v1047 = vmul.f32 %v1042, 1.442695
        %v1048 = vpow.pop %v1047
        %v1049 = vmul.f32 %v1043, 1.442695
        %v1050 = vpow.pop %v1049
        %v1051 = vmul.f32 %v1044, 1.442695
        %v1052 = vpow.pop %v1051
        %v1053 = vadd.f32 %v1046, 1.0
        %v1054 = vadd.f32 %v1048, 1.0
        %v1055 = vadd.f32 %v1050, 1.0
        %v1056 = vadd.f32 %v1052, 1.0
        %v1057 = vrcp.pop %v1053
        %v1058 = vmul.f32 1.0, %v1057
        %v1059 = vrcp.pop %v1054
        %v1060 = vmul.f32 1.0, %v1059
        %v1061 = vrcp.pop %v1055
        %v1062 = vmul.f32 1.0, %v1061
        %v1063 = vrcp.pop %v1056
        %v1064 = vmul.f32 1.0, %v1063
        %1065 = vst [vmem:[%s439] sm:$0xff] %v1058
        %1066 = vst [vmem:[%s439 + $0x8] sm:$0xff] %v1060
        %1067 = vst [vmem:[%s439 + $0x10] sm:$0xff] %v1062
        %1068 = vst [vmem:[%s439 + $0x18] sm:$0xff] %v1064
        %s1069 = sand.u32 %s272, 1
        %s1070 = scalar_lea.sflag [#allocation4], %s1069
        %s1071 = sand.u32 %s272, 1
        %s1072 = smul.addr %s1071, 32
        %s1073 = scalar_lea.vmem [#allocation10], %s1072
        // Predicated region
        $region81: #{tpu_custom_call.1} parent=63 // pred_check
          %p1074 = pneg %p282
        $region82: #{tpu_custom_call.1} parent=63 // pred_check_branch
          %1076 = sbr.rel (%p1074) target = $region84
        $region83: #{tpu_custom_call.1} parent=63 // pred_region
          %s1077 = smul.u32 4, %s28
          %s1079 = ssub.s32 512, 512
          %1080 = vsyncadd %s1070, %s1079
          %s1081 = smul.addr %s1077, 128
          %s1082 = scalar_lea.hbm %s11, %s1081
          %s1083 = sshll.u32 %s1073, 4
          %s1084 = int_to_ptr.vmem [resolvable:$true] %s1083
          %1089 = dma.vmem_to_hbm [thread:$0]  %s1084, 512, %s1082, %s1070, 128, 128, 8
        $region84: #{tpu_custom_call.1} parent=63 // pred_fallthru
          _
      $region64: #{tpu_custom_call.1} parent=5 // pred_fallthru
        _
      %p1090 = scmp.le.s32.totalorder 2, %s23
      // Predicated region
      $region85: #{tpu_custom_call.1} parent=5 // pred_check
        %p1091 = pneg %p1090
      $region86: #{tpu_custom_call.1} parent=5 // pred_check_branch
        %1093 = sbr.rel (%p1091) target = $region88
      $region87: #{tpu_custom_call.1} parent=5 // pred_region
        %s1094 = ssub.s32 %s23, 2
        // Predicated region
        $region89: #{tpu_custom_call.1} parent=87 // pred_check
          %p1095 = pneg %p288
        $region90: #{tpu_custom_call.1} parent=87 // pred_check_branch
          %1097 = sbr.rel (%p1095) target = $region92
        $region91: #{tpu_custom_call.1} parent=87 // pred_region
          %s1098 = sand.u32 %s273, 1
          %s1099 = scalar_lea.sflag [#allocation4], %s1098
          %s1100 = sand.u32 %s273, 1
          %s1101 = smul.addr %s1100, 32
          %s1102 = scalar_lea.vmem [#allocation10], %s1101
          %1103 = dma.done %s1099, 512
        $region92: #{tpu_custom_call.1} parent=87 // pred_fallthru
          _
      $region88: #{tpu_custom_call.1} parent=5 // pred_fallthru
        _
    $region6: #{tpu_custom_call.1} parent=1 // loop_footer
      %s27 = sadd.s32 1, %s23
    $region7: #{tpu_custom_call.1} parent=1 // loop_footer_branch
      %22 = sbr.rel target = $region3
    $region8: #{tpu_custom_call.1} parent=1 // loop_exit
      _
    %1104 = vsyncpa [#allocation3], 1
    %s1105 = scalar_lea.sflag [#allocation3], 1
    %1106 = vsyncpa %s1105, 1
    %1107 = vsyncpa [#allocation6], 1
    %1108 = vsyncpa [#allocation9], 1
    %1109 = vsyncpa [#allocation4], 1
    %s1110 = scalar_lea.sflag [#allocation4], 1
    %1111 = vsyncpa %s1110, 1

</llo_original>
